<compile_context>
chip_gen: v5e
topology: v5e:2x2
jax: 0.10.0
libtpu: 0.0.40
codegen_flags: <defaults>
</compile_context>

<pallas_src>
import math

import jax
import jax.numpy as jnp
from jax.experimental import pallas as pl
from jax.experimental.pallas import tpu as pltpu


def _standardize_kernel(x_ref, mu_ref, inv_sigma_ref, o_ref):
    # x_ref / o_ref : (TB, G*L*D)    mu_ref / inv_sigma_ref : (1, G*L*D)
    o_ref[...] = (x_ref[...] - mu_ref[...]) * inv_sigma_ref[...]


def _vmem_capacity_bytes():
    """Physical VMEM capacity, with a conservative (v7x-sized) fallback."""
    try:
        return int(pltpu.get_tpu_info().vmem_capacity_bytes)
    except Exception:
        return 64 << 20


def _pack_factor(ld):
    """Smallest multiple of 8 batch rows per super-row making G*LD % 128 == 0."""
    k = 16 // math.gcd(ld, 16)
    g = 8 * k
    return g if g <= 64 else 8  # cap padding waste for awkward L*D


def _plan_row_blocks(r_rows, row_bytes, target_bytes):
    """Pick (rows-per-block, grid-steps) over the packed-row axis."""
    # Tiny problems: one full-extent block (always a legal block shape).
    if r_rows <= 8 or (r_rows < 16 and r_rows * row_bytes <= target_bytes):
        return r_rows, 1
    # Otherwise: at least 2 steps (v7x megacore sharding), ~target_bytes/block,
    # block rows a multiple of 8 (sublane constraint).
    n_steps = max(2, pl.cdiv(r_rows * row_bytes, target_bytes))
    tb = max(8, ((pl.cdiv(r_rows, n_steps) + 7) // 8) * 8)
    return tb, pl.cdiv(r_rows, tb)


def standardizer_sequence_vector_forward(x, mu, sigma, *, fitted=True,
                                         target_block_bytes=None):
    """y = (x - mu) / sigma with mu/sigma broadcast over the batch axis."""
    assert fitted, "Standardizer not fitted!"
    B, L, D = x.shape
    assert mu.shape == (L, D) and sigma.shape == (L, D)
    LD = L * D
    itemsize = jnp.dtype(x.dtype).itemsize

    vmem_cap = _vmem_capacity_bytes()
    if target_block_bytes is None:
        # ~4 MiB blocks on 64 MiB VMEM (v7x), ~8 MiB on 128 MiB (v5e/v6e).
        target_block_bytes = max(1 << 20, min(8 << 20, vmem_cap // 16))

    # --- Lane-dense packing: (B, L, D) -> (R, G*L*D), G batch rows per super-row.
    G = _pack_factor(LD)
    W = G * LD
    row_bytes = W * itemsize
    R = pl.cdiv(B, G)
    B_pad = R * G

    x2 = x.reshape(B, LD)
    if B_pad > B:
        x2 = jnp.pad(x2, ((0, B_pad - B), (0, 0)))
    xp = x2.reshape(R, W)

    # mu / 1/sigma repeated G times along lanes (O(L*D) wrapper work, done once).
    mu_p = jnp.tile(mu.reshape(1, LD), (1, G)).astype(x.dtype)
    inv_sigma_p = jnp.tile((1.0 / sigma).reshape(1, LD), (1, G)).astype(x.dtype)

    tb, grid = _plan_row_blocks(R, row_bytes, target_block_bytes)

    block_bytes = tb * row_bytes
    # Double-buffered x-in + y-out (4 block buffers) plus headroom, capped well
    # below physical VMEM on every generation.
    vmem_limit = int(min(vmem_cap - (16 << 20),
                         max(32 << 20, 6 * block_bytes + (4 << 20))))

    yp = pl.pallas_call(
        _standardize_kernel,
        out_shape=jax.ShapeDtypeStruct((R, W), x.dtype),
        grid=(grid,),
        in_specs=[
            pl.BlockSpec((tb, W), lambda i: (i, 0)),   # x: one packed-row chunk / step
            pl.BlockSpec((1, W), lambda i: (0, 0)),    # mu: same block every step
            pl.BlockSpec((1, W), lambda i: (0, 0)),    # 1/sigma: same block every step
        ],
        out_specs=pl.BlockSpec((tb, W), lambda i: (i, 0)),
        compiler_params=pltpu.CompilerParams(
            # Packed-row chunks are independent -> megacore-shardable on v7x.
            dimension_semantics=("parallel",),
            vmem_limit_bytes=vmem_limit,
        ),
    )(xp, mu_p, inv_sigma_p)

    # Unpack and drop the batch padding.
    return yp.reshape(B_pad, LD)[:B].reshape(B, L, D)


if __name__ == "__main__":
    # Module defaults: input_dim=20, max_len=12.
    max_len, input_dim = 12, 20

    key = jax.random.PRNGKey(0)
    k_x, k_mu, k_sigma, k_x2 = jax.random.split(key, 4)

    # Deterministic "fitted" parameters (as if .fit() had been called).
    mu = jax.random.normal(k_mu, (max_len, input_dim), dtype=jnp.float32)
    sigma = jnp.abs(jax.random.normal(k_sigma, (max_len, input_dim),
                                      dtype=jnp.float32)) + 0.5

    # Case 1: tiny batch -> padded into one packed super-row, single block.
    batch = 2
    x = jax.random.normal(k_x, (batch, max_len, input_dim), dtype=jnp.float32)
    y = jax.block_until_ready(standardizer_sequence_vector_forward(x, mu, sigma))
    y_ref = (x - mu[None, :, :]) / sigma[None, :, :]
    assert y.shape == (batch, max_len, input_dim)
    assert jnp.allclose(y, y_ref, atol=1e-5, rtol=1e-5)

    # Case 2: batch not a multiple of the packing factor, small block target to
    # exercise the multi-step "parallel" grid with a partial (masked) last block.
    batch2 = 300
    x_big = jax.random.normal(k_x2, (batch2, max_len, input_dim), dtype=jnp.float32)
    small_target = 8 * 8 * max_len * input_dim * 4   # ~8 packed rows per block
    y_big = jax.block_until_ready(
        standardizer_sequence_vector_forward(x_big, mu, sigma,
                                             target_block_bytes=small_target))
    y_big_ref = (x_big - mu[None, :, :]) / sigma[None, :, :]
    assert jnp.allclose(y_big, y_big_ref, atol=1e-5, rtol=1e-5)

    # Case 3: default (generation-aware) block sizing on the same batch; the
    # planner forces >=2 grid steps so both v7x TensorCores pull HBM.
    y_def = jax.block_until_ready(
        standardizer_sequence_vector_forward(x_big, mu, sigma))
    assert jnp.allclose(y_def, y_big_ref, atol=1e-5, rtol=1e-5)

    print("KERNEL_OK")
</pallas_src>

<mosaic_0001>
module attributes {stable_mosaic.version = 11 : i64} {
  func.func @_standardize_kernel(%arg0: i32, %arg1: memref<1x1920xf32, #tpu.memory_space<vmem>>, %arg2: memref<1x1920xf32, #tpu.memory_space<vmem>>, %arg3: memref<1x1920xf32, #tpu.memory_space<vmem>>, %arg4: memref<1x1920xf32, #tpu.memory_space<vmem>>) attributes {dimension_semantics = [#tpu.dimension_semantics<parallel>], iteration_bounds = array<i64: 1>, scalar_prefetch = 0 : i64, scratch_operands = 0 : i64, tpu.core_type = #tpu.core_type<tc>, window_params = [{transform_indices = @transform_0, window_bounds = array<i64: 1, 1920>}, {pipeline_mode = #tpu.pipeline_mode<synchronous>, transform_indices = @transform_1, window_bounds = array<i64: 1, 1920>}, {pipeline_mode = #tpu.pipeline_mode<synchronous>, transform_indices = @transform_2, window_bounds = array<i64: 1, 1920>}, {transform_indices = @transform_3, window_bounds = array<i64: 1, 1920>}]} {
    %c0 = arith.constant 0 : index
    %c0_0 = arith.constant 0 : index
    %0 = vector.load %arg1[%c0, %c0_0] : memref<1x1920xf32, #tpu.memory_space<vmem>>, vector<1x1920xf32>
    %c0_1 = arith.constant 0 : index
    %c0_2 = arith.constant 0 : index
    %1 = vector.load %arg2[%c0_1, %c0_2] : memref<1x1920xf32, #tpu.memory_space<vmem>>, vector<1x1920xf32>
    %2 = arith.subf %0, %1 : vector<1x1920xf32>
    %c0_3 = arith.constant 0 : index
    %c0_4 = arith.constant 0 : index
    %3 = vector.load %arg3[%c0_3, %c0_4] : memref<1x1920xf32, #tpu.memory_space<vmem>>, vector<1x1920xf32>
    %4 = arith.mulf %2, %3 : vector<1x1920xf32>
    %c0_5 = arith.constant 0 : index
    %c0_6 = arith.constant 0 : index
    %5 = vector.load %arg4[%c0_5, %c0_6] : memref<1x1920xf32, #tpu.memory_space<vmem>>, vector<1x1920xf32>
    tpu.vector_store %arg4[%c0_5, %c0_6], %4 {strides = array<i32>} : memref<1x1920xf32, #tpu.memory_space<vmem>>, vector<1x1920xf32>,
    return
  }
  func.func @transform_0(%arg0: i32) -> (i32, i32) {
    %c0_i32 = arith.constant 0 : i32
    %c0_i32_0 = arith.constant 0 : i32
    return %arg0, %c0_i32 : i32, i32
  }
  func.func @transform_1(%arg0: i32) -> (i32, i32) {
    %c0_i32 = arith.constant 0 : i32
    %c0_i32_0 = arith.constant 0 : i32
    %c0_i32_1 = arith.constant 0 : i32
    return %c0_i32, %c0_i32_0 : i32, i32
  }
  func.func @transform_2(%arg0: i32) -> (i32, i32) {
    %c0_i32 = arith.constant 0 : i32
    %c0_i32_0 = arith.constant 0 : i32
    %c0_i32_1 = arith.constant 0 : i32
    return %c0_i32, %c0_i32_0 : i32, i32
  }
  func.func @transform_3(%arg0: i32) -> (i32, i32) {
    %c0_i32 = arith.constant 0 : i32
    %c0_i32_0 = arith.constant 0 : i32
    return %arg0, %c0_i32 : i32, i32
  }
}

</mosaic_0001>

<llo_original>
// kernel: tpu_custom_call.1
$region0: #{tpu_custom_call.1}
  #allocation0 [shape = 'u32[]', space=smem, size = 0x4, offset = 0x4, fixed_abs, tag = 'smem constant byte address 0x4 - core index']
  #allocation1 [shape = 'u32[72,128]{1,0:T(1,128)}', space=vmem, size = 0x9000, scoped, tag = 'internal scratch']
  %s0 = inlined_call_operand.hbm [shape: f32[1,1920], index: 0, kind: input, shape index: {}]
  %s1 = inlined_call_operand.hbm [shape: f32[1,1920], index: 1, kind: input, shape index: {}]
  %s2 = inlined_call_operand.hbm [shape: f32[1,1920], index: 2, kind: input, shape index: {}]
  %s3 = inlined_call_operand.hbm [shape: f32[1,1920], index: 3, kind: output, shape index: {}]
  %s4 = sld [smem:[#allocation0]]
  $region34: #{tpu_custom_call.1} parent=0
    _
  %s6 = ssub.s32 1, %s4
  %s7 = scalar_select 0, %s6, %s4
  $region1: #{tpu_custom_call.1} parent=0
    #allocation2 [shape = 'u8[7680]{0}', space=vmem, size = 0x2000, scoped, tag = 'input window, operand 0, single buffered']
    #allocation3 [shape = 's32[1]{0}', space=sflag, size = 0x4, scoped, tag = 'scoped memory for tpu_custom_call.1']
    #allocation4 [shape = 's32[1]{0}', space=sflag, size = 0x4, scoped, tag = 'scoped memory for tpu_custom_call.1']
    #allocation5 [shape = 'u8[7680]{0}', space=vmem, size = 0x2000, scoped, tag = 'input window, operand 1, single buffered']
    #allocation6 [shape = 's32[1]{0}', space=sflag, size = 0x4, scoped, tag = 'scoped memory for tpu_custom_call.1']
    #allocation7 [shape = 'u8[7680]{0}', space=vmem, size = 0x2000, scoped, tag = 'input window, operand 2, single buffered']
    #allocation8 [shape = 'u8[7680]{0}', space=vmem, size = 0x2000, scoped, tag = 'output window, operand 0, single buffered']
    %8 = vsyncpa [#allocation3], 0
    %9 = vsyncpa [#allocation6], 0
    %10 = vsyncpa [#allocation4], 0
    // Predicated region
    $region2: #{tpu_custom_call.1} parent=1 // pred_check
      _
    $region3: #{tpu_custom_call.1} parent=1 // pred_check_branch
      %12 = sbr.rel (0) target = $region5
    $region4: #{tpu_custom_call.1} parent=1 // pred_region
      %14 = vsyncadd [#allocation3], 0
      %s16 = sshll.u32 %s0, 4
      %s17 = int_to_ptr.hbm [resolvable:$true] %s16
      %s18 = sshll.u32 [#allocation2], 4
      %s19 = int_to_ptr.vmem [resolvable:$true] %s18
      %21 = dma.hbm_to_vmem [thread:$0]  %s17, 240, %s19, [#allocation3]
    $region5: #{tpu_custom_call.1} parent=1 // pred_fallthru
      _
    // Predicated region
    $region6: #{tpu_custom_call.1} parent=1 // pred_check
      _
    $region7: #{tpu_custom_call.1} parent=1 // pred_check_branch
      %23 = sbr.rel (0) target = $region9
    $region8: #{tpu_custom_call.1} parent=1 // pred_region
      %25 = vsyncadd [#allocation6], 0
      %s27 = sshll.u32 %s1, 4
      %s28 = int_to_ptr.hbm [resolvable:$true] %s27
      %s29 = sshll.u32 [#allocation5], 4
      %s30 = int_to_ptr.vmem [resolvable:$true] %s29
      %32 = dma.hbm_to_vmem [thread:$0]  %s28, 240, %s30, [#allocation6]
    $region9: #{tpu_custom_call.1} parent=1 // pred_fallthru
      _
    // Predicated region
    $region10: #{tpu_custom_call.1} parent=1 // pred_check
      _
    $region11: #{tpu_custom_call.1} parent=1 // pred_check_branch
      %34 = sbr.rel (0) target = $region13
    $region12: #{tpu_custom_call.1} parent=1 // pred_region
      %36 = vsyncadd [#allocation6], 0
      %s38 = sshll.u32 %s2, 4
      %s39 = int_to_ptr.hbm [resolvable:$true] %s38
      %s40 = sshll.u32 [#allocation7], 4
      %s41 = int_to_ptr.vmem [resolvable:$true] %s40
      %43 = dma.hbm_to_vmem [thread:$0]  %s39, 240, %s41, [#allocation6]
    $region13: #{tpu_custom_call.1} parent=1 // pred_fallthru
      _
    // Predicated region
    $region14: #{tpu_custom_call.1} parent=1 // pred_check
      _
    $region15: #{tpu_custom_call.1} parent=1 // pred_check_branch
      %45 = sbr.rel (0) target = $region17
    $region16: #{tpu_custom_call.1} parent=1 // pred_region
      %47 = dma.done [#allocation3], 240
    $region17: #{tpu_custom_call.1} parent=1 // pred_fallthru
      _
    // Predicated region
    $region18: #{tpu_custom_call.1} parent=1 // pred_check
      _
    $region19: #{tpu_custom_call.1} parent=1 // pred_check_branch
      %49 = sbr.rel (0) target = $region21
    $region20: #{tpu_custom_call.1} parent=1 // pred_region
      %51 = dma.done [#allocation6], 240
    $region21: #{tpu_custom_call.1} parent=1 // pred_fallthru
      _
    // Predicated region
    $region22: #{tpu_custom_call.1} parent=1 // pred_check
      _
    $region23: #{tpu_custom_call.1} parent=1 // pred_check_branch
      %53 = sbr.rel (0) target = $region25
    $region24: #{tpu_custom_call.1} parent=1 // pred_region
      %55 = dma.done [#allocation6], 240
    $region25: #{tpu_custom_call.1} parent=1 // pred_fallthru
      _
    %v56 = vld [vmem:[#allocation2] sm:$0xff]
    %v57 = vld [vmem:[#allocation2 + $0x8] sm:$0xff]
    %v58 = vld [vmem:[#allocation5] sm:$0xff]
    %v59 = vld [vmem:[#allocation5 + $0x8] sm:$0xff]
    %v60 = vsub.f32 %v56, %v58
    %v61 = vsub.f32 %v57, %v59
    %v62 = vld [vmem:[#allocation7] sm:$0xff]
    %v63 = vld [vmem:[#allocation7 + $0x8] sm:$0xff]
    %v64 = vmul.f32 %v60, %v62
    %v65 = vmul.f32 %v61, %v63
    %66 = vst [vmem:[#allocation8] sm:$0xff] %v64
    %v67 = vlaneseq
    %vm68 = vcmp.ge.s32.totalorder %v67, 0
    %vm69 = vcmp.lt.s32.totalorder %v67, 896
    %vm70 = vmand %vm68, %vm69
    %71 = vst.msk [vmem:[#allocation8 + $0x8] sm:$0x7f] %vm70, %v65
    // Predicated region
    $region26: #{tpu_custom_call.1} parent=1 // pred_check
      _
    $region27: #{tpu_custom_call.1} parent=1 // pred_check_branch
      %73 = sbr.rel (0) target = $region29
    $region28: #{tpu_custom_call.1} parent=1 // pred_region
      %75 = vsyncadd [#allocation4], 0
      %s77 = sshll.u32 [#allocation8], 4
      %s78 = int_to_ptr.vmem [resolvable:$true] %s77
      %s79 = sshll.u32 %s3, 4
      %s80 = int_to_ptr.hbm [resolvable:$true] %s79
      %82 = dma.vmem_to_hbm [thread:$0]  %s78, 240, %s80, [#allocation4]
    $region29: #{tpu_custom_call.1} parent=1 // pred_fallthru
      _
    // Predicated region
    $region30: #{tpu_custom_call.1} parent=1 // pred_check
      _
    $region31: #{tpu_custom_call.1} parent=1 // pred_check_branch
      %84 = sbr.rel (0) target = $region33
    $region32: #{tpu_custom_call.1} parent=1 // pred_region
      %86 = dma.done [#allocation4], 240
    $region33: #{tpu_custom_call.1} parent=1 // pred_fallthru
      _
    %87 = vsyncpa [#allocation3], 1
    %88 = vsyncpa [#allocation6], 1
    %89 = vsyncpa [#allocation4], 1

</llo_original>
